<compile_context>
chip_gen: v7x
topology: tpu7x:2x2x1
jax: 0.10.0
libtpu: 0.0.40
codegen_flags: <defaults>
</compile_context>

<pallas_src>
import functools

import jax
import jax.numpy as jnp
from jax.experimental import pallas as pl
from jax.experimental.pallas import tpu as pltpu

BN_EPS = 1e-5


def _vmem_limit(estimate_bytes):
    # 2x margin on the tile estimate, clamped to a v7x-safe range.
    return int(min(48 << 20, max(16 << 20, 2 * estimate_bytes)))


# ---------------------------------------------------------------------------
# Kernel 1: tiled encoder Linear    y = flatten(x) @ We + be
# ---------------------------------------------------------------------------
def _encoder_kernel(x_ref, w_ref, b_ref, y_ref, acc_ref):
    k = pl.program_id(2)

    @pl.when(k == 0)
    def _():
        acc_ref[...] = jnp.zeros_like(acc_ref)

    acc_ref[...] += jnp.dot(x_ref[...], w_ref[...],
                            preferred_element_type=jnp.float32)

    @pl.when(k == pl.num_programs(2) - 1)
    def _():
        y_ref[...] = (acc_ref[...] + b_ref[...]).astype(y_ref.dtype)


def encoder_linear(x_bf16, w_bf16, b_f32, *, tm=256, tn=512, tk=512):
    M, K = x_bf16.shape
    _, N = w_bf16.shape
    tm, tn, tk = min(tm, M), min(tn, N), min(tk, K)
    assert M % tm == 0 and N % tn == 0 and K % tk == 0

    est = 2 * (tm * tk * 2 + tk * tn * 2 + tn * 4 + tm * tn * 4) + tm * tn * 4
    cost = pl.CostEstimate(
        flops=2 * M * N * K,
        transcendentals=0,
        bytes_accessed=M * K * 2 + K * N * 2 + M * N * 4 + N * 4,
    )
    return pl.pallas_call(
        _encoder_kernel,
        out_shape=jax.ShapeDtypeStruct((M, N), jnp.float32),
        grid_spec=pltpu.PrefetchScalarGridSpec(
            num_scalar_prefetch=0,
            grid=(M // tm, N // tn, K // tk),
            in_specs=[
                pl.BlockSpec((tm, tk), lambda i, j, k: (i, k)),
                pl.BlockSpec((tk, tn), lambda i, j, k: (k, j)),
                pl.BlockSpec((1, tn), lambda i, j, k: (0, j)),
            ],
            out_specs=pl.BlockSpec((tm, tn), lambda i, j, k: (i, j)),
            scratch_shapes=[pltpu.VMEM((tm, tn), jnp.float32)],
        ),
        compiler_params=pltpu.CompilerParams(
            dimension_semantics=("parallel", "parallel", "arbitrary"),
            vmem_limit_bytes=_vmem_limit(est),
        ),
        cost_estimate=cost,
    )(x_bf16, w_bf16, b_f32)


# ---------------------------------------------------------------------------
# Kernel 2 (MLP pass 1): t = a @ W1  + per-feature sum / sum-of-squares
# Stats outputs stay VMEM-resident across the batch grid axis ("arbitrary"),
# so full-batch BatchNorm statistics are exact under batch tiling.
# ---------------------------------------------------------------------------
def _mlp_pass1_kernel(a_ref, w1_ref, t_ref, sum_ref, ssq_ref):
    i = pl.program_id(0)
    t = jnp.dot(a_ref[...], w1_ref[...], preferred_element_type=jnp.float32)
    t_ref[...] = t

    @pl.when(i == 0)
    def _():
        sum_ref[...] = jnp.zeros_like(sum_ref)
        ssq_ref[...] = jnp.zeros_like(ssq_ref)

    sum_ref[...] += jnp.sum(t, axis=0, keepdims=True)
    ssq_ref[...] += jnp.sum(t * t, axis=0, keepdims=True)


# ---------------------------------------------------------------------------
# Kernel 3 (MLP pass 2): BatchNorm (batch stats, f32) -> ReLU -> Linear(+bias)
# ---------------------------------------------------------------------------
def _mlp_pass2_kernel(t_ref, sum_ref, ssq_ref, g_ref, bta_ref, w2_ref, b2_ref,
                      o_ref, *, batch_size):
    inv_b = jnp.float32(1.0 / batch_size)
    mu = sum_ref[...] * inv_b
    var = ssq_ref[...] * inv_b - mu * mu          # biased variance, as BN forward
    t = t_ref[...]
    tn = (t - mu) * jax.lax.rsqrt(var + BN_EPS)
    tn = tn * g_ref[...] + bta_ref[...]
    tn = jnp.maximum(tn, 0.0)
    out = jnp.dot(tn.astype(jnp.bfloat16), w2_ref[...],
                  preferred_element_type=jnp.float32)
    o_ref[...] = (out + b2_ref[...]).astype(o_ref.dtype)


def mlp_forward(a_f32, w1_bf16, gamma, beta, w2_bf16, b2, *, tb=128):
    B, D_in = a_f32.shape
    D_h = w1_bf16.shape[1]
    D_out = w2_bf16.shape[1]
    tb = min(tb, B)
    assert B % tb == 0
    a_bf16 = a_f32.astype(jnp.bfloat16)

    # ---- pass 1: matmul + stats accumulation -------------------------------
    est1 = 2 * (tb * D_in * 2 + D_in * D_h * 2 + tb * D_h * 4) + 4 * D_h * 4
    t, s, ss = pl.pallas_call(
        _mlp_pass1_kernel,
        out_shape=(
            jax.ShapeDtypeStruct((B, D_h), jnp.float32),
            jax.ShapeDtypeStruct((1, D_h), jnp.float32),
            jax.ShapeDtypeStruct((1, D_h), jnp.float32),
        ),
        grid_spec=pltpu.PrefetchScalarGridSpec(
            num_scalar_prefetch=0,
            grid=(B // tb,),
            in_specs=[
                pl.BlockSpec((tb, D_in), lambda i: (i, 0)),
                pl.BlockSpec((D_in, D_h), lambda i: (0, 0)),
            ],
            out_specs=(
                pl.BlockSpec((tb, D_h), lambda i: (i, 0)),
                pl.BlockSpec((1, D_h), lambda i: (0, 0)),
                pl.BlockSpec((1, D_h), lambda i: (0, 0)),
            ),
        ),
        compiler_params=pltpu.CompilerParams(
            # "arbitrary": the stats accumulators must see every batch tile.
            # TODO(synk): v7x dual-core split would need per-core partial stats
            #             combined via CMEM/VMEM_SHARED before pass 2.
            dimension_semantics=("arbitrary",),
            vmem_limit_bytes=_vmem_limit(est1),
        ),
        cost_estimate=pl.CostEstimate(
            flops=2 * B * D_in * D_h + 4 * B * D_h,
            transcendentals=0,
            bytes_accessed=B * D_in * 2 + D_in * D_h * 2 + B * D_h * 4 + 2 * D_h * 4,
        ),
    )(a_bf16, w1_bf16)

    # ---- pass 2: normalize + gamma/beta + ReLU + second Linear -------------
    est2 = 2 * (tb * D_h * 4 + 4 * D_h * 4 + D_h * D_out * 2 + D_out * 4
                + tb * D_out * 4)
    kernel2 = functools.partial(_mlp_pass2_kernel, batch_size=float(B))
    out = pl.pallas_call(
        kernel2,
        out_shape=jax.ShapeDtypeStruct((B, D_out), jnp.float32),
        grid_spec=pltpu.PrefetchScalarGridSpec(
            num_scalar_prefetch=0,
            grid=(B // tb,),
            in_specs=[
                pl.BlockSpec((tb, D_h), lambda i: (i, 0)),
                pl.BlockSpec((1, D_h), lambda i: (0, 0)),
                pl.BlockSpec((1, D_h), lambda i: (0, 0)),
                pl.BlockSpec((1, D_h), lambda i: (0, 0)),
                pl.BlockSpec((1, D_h), lambda i: (0, 0)),
                pl.BlockSpec((D_h, D_out), lambda i: (0, 0)),
                pl.BlockSpec((1, D_out), lambda i: (0, 0)),
            ],
            out_specs=pl.BlockSpec((tb, D_out), lambda i: (i, 0)),
        ),
        compiler_params=pltpu.CompilerParams(
            dimension_semantics=("parallel",),
            vmem_limit_bytes=_vmem_limit(est2),
        ),
        cost_estimate=pl.CostEstimate(
            flops=2 * B * D_h * D_out + 8 * B * D_h,
            transcendentals=D_h,
            bytes_accessed=B * D_h * 4 + D_h * D_out * 2 + B * D_out * 4
                           + 4 * D_h * 4 + D_out * 4,
        ),
    )(t, s, ss, gamma, beta, w2_bf16, b2)
    return out


# ---------------------------------------------------------------------------
# Forward wrapper
# ---------------------------------------------------------------------------
def siamese_arm_forward(x, params, *, mlp_batch_tile=128):
    """x: [B, C, H, W] float32 (NCHW). Returns (y, z, h) in float32."""
    B = x.shape[0]
    x_flat = x.reshape(B, -1).astype(jnp.bfloat16)   # torch.flatten(x, 1) + bf16 MXU operand

    (we, be, pw1, pg, pb, pw2, pb2, qw1, qg, qb, qw2, qb2) = params

    y = encoder_linear(x_flat, we, be)
    z = mlp_forward(y, pw1, pg, pb, pw2, pb2, tb=mlp_batch_tile)
    h = mlp_forward(z, qw1, qg, qb, qw2, qb2, tb=mlp_batch_tile)
    return y, z, h


def init_params(key, flat_dim, input_dim, hidden_size, output_dim):
    ks = jax.random.split(key, 8)
    scale = 0.02
    bf = jnp.bfloat16

    # encoder Linear(flat_dim, input_dim); weights stored (in, out), bf16 in HBM
    we = (scale * jax.random.normal(ks[0], (flat_dim, input_dim), jnp.float32)).astype(bf)
    be = scale * jax.random.normal(ks[1], (1, input_dim), jnp.float32)

    # projector MLP(input_dim, hidden, output_dim)
    pw1 = (scale * jax.random.normal(ks[2], (input_dim, hidden_size), jnp.float32)).astype(bf)
    pg = jnp.ones((1, hidden_size), jnp.float32)    # BatchNorm gamma
    pb = jnp.zeros((1, hidden_size), jnp.float32)   # BatchNorm beta
    pw2 = (scale * jax.random.normal(ks[3], (hidden_size, output_dim), jnp.float32)).astype(bf)
    pb2 = scale * jax.random.normal(ks[4], (1, output_dim), jnp.float32)

    # predictor MLP(output_dim, hidden, output_dim)
    qw1 = (scale * jax.random.normal(ks[5], (output_dim, hidden_size), jnp.float32)).astype(bf)
    qg = jnp.ones((1, hidden_size), jnp.float32)
    qb = jnp.zeros((1, hidden_size), jnp.float32)
    qw2 = (scale * jax.random.normal(ks[6], (hidden_size, output_dim), jnp.float32)).astype(bf)
    qb2 = scale * jax.random.normal(ks[7], (1, output_dim), jnp.float32)

    return (we, be, pw1, pg, pb, pw2, pb2, qw1, qg, qb, qw2, qb2)


def _reference(x, params):
    # Pure-JAX reference with the same bf16-operand / f32-accumulate numerics.
    (we, be, pw1, pg, pb, pw2, pb2, qw1, qg, qb, qw2, qb2) = params
    B = x.shape[0]
    xf = x.reshape(B, -1).astype(jnp.bfloat16)
    y = jnp.dot(xf, we, preferred_element_type=jnp.float32) + be

    def mlp(a, w1, g, b, w2, b2):
        t = jnp.dot(a.astype(jnp.bfloat16), w1, preferred_element_type=jnp.float32)
        mu = jnp.mean(t, axis=0, keepdims=True)
        var = jnp.mean(t * t, axis=0, keepdims=True) - mu * mu
        t = (t - mu) * jax.lax.rsqrt(var + BN_EPS)
        t = jnp.maximum(t * g + b, 0.0)
        return jnp.dot(t.astype(jnp.bfloat16), w2, preferred_element_type=jnp.float32) + b2

    z = mlp(y, pw1, pg, pb, pw2, pb2)
    h = mlp(z, qw1, qg, qb, qw2, qb2)
    return y, z, h


if __name__ == "__main__":
    # Small, lane-aligned shapes (feature dims multiples of 128) consistent with
    # SiameseArm's defaults (2048/4096/256), scaled down.
    B, C, H, W = 32, 4, 16, 16
    input_dim, hidden_size, output_dim = 128, 256, 128
    flat_dim = C * H * W

    key = jax.random.PRNGKey(0)
    kx, kp = jax.random.split(key)
    x = jax.random.normal(kx, (B, C, H, W), jnp.float32)
    params = init_params(kp, flat_dim, input_dim, hidden_size, output_dim)

    # mlp_batch_tile=8 -> 4 batch tiles, exercising cross-tile BN stat accumulation.
    y, z, h = jax.block_until_ready(siamese_arm_forward(x, params, mlp_batch_tile=8))

    assert y.shape == (B, input_dim) and y.dtype == jnp.float32
    assert z.shape == (B, output_dim) and z.dtype == jnp.float32
    assert h.shape == (B, output_dim) and h.dtype == jnp.float32

    y_r, z_r, h_r = _reference(x, params)
    for got, ref in ((y, y_r), (z, z_r), (h, h_r)):
        err = float(jnp.max(jnp.abs(got - ref)))
        assert jnp.allclose(got, ref, rtol=3e-2, atol=3e-2), err

    print("KERNEL_OK")
</pallas_src>

<mosaic_0001>
module attributes {stable_mosaic.version = 11 : i64} {
  func.func @_encoder_kernel(%arg0: i32, %arg1: i32, %arg2: i32, %arg3: memref<32x512xbf16, #tpu.memory_space<vmem>>, %arg4: memref<512x128xbf16, #tpu.memory_space<vmem>>, %arg5: memref<1x128xf32, #tpu.memory_space<vmem>>, %arg6: memref<32x128xf32, #tpu.memory_space<vmem>>, %arg7: memref<32x128xf32, #tpu.memory_space<vmem>>) attributes {dimension_semantics = [#tpu.dimension_semantics<parallel>, #tpu.dimension_semantics<parallel>, #tpu.dimension_semantics<arbitrary>], iteration_bounds = array<i64: 1, 1, 2>, scalar_prefetch = 0 : i64, scratch_operands = 1 : i64, tpu.core_type = #tpu.core_type<tc>, window_params = [{transform_indices = @transform_0, window_bounds = array<i64: 32, 512>}, {transform_indices = @transform_1, window_bounds = array<i64: 512, 128>}, {transform_indices = @transform_2, window_bounds = array<i64: 1, 128>}, {transform_indices = @transform_3, window_bounds = array<i64: 32, 128>}]} {
    %c0_i32 = arith.constant 0 : i32
    %0 = arith.cmpi eq, %arg2, %c0_i32 : i32
    %1 = arith.extui %0 : i1 to i32
    %c0_i32_0 = arith.constant 0 : i32
    %2 = arith.cmpi ne, %1, %c0_i32_0 : i32
    scf.if %2 {
      %cst_9 = arith.constant 0.000000e+00 : f32
      %12 = vector.broadcast %cst_9 : f32 to vector<32x128xf32>
      %c0_10 = arith.constant 0 : index
      %c0_11 = arith.constant 0 : index
      %13 = vector.load %arg7[%c0_10, %c0_11] : memref<32x128xf32, #tpu.memory_space<vmem>>, vector<32x128xf32>
      tpu.vector_store %arg7[%c0_10, %c0_11], %12 {strides = array<i32>} : memref<32x128xf32, #tpu.memory_space<vmem>>, vector<32x128xf32>,
    } else {
    }
    %c0 = arith.constant 0 : index
    %c0_1 = arith.constant 0 : index
    %3 = vector.load %arg7[%c0, %c0_1] : memref<32x128xf32, #tpu.memory_space<vmem>>, vector<32x128xf32>
    %c0_2 = arith.constant 0 : index
    %c0_3 = arith.constant 0 : index
    %4 = vector.load %arg3[%c0_2, %c0_3] : memref<32x512xbf16, #tpu.memory_space<vmem>>, vector<32x512xbf16>
    %c0_4 = arith.constant 0 : index
    %c0_5 = arith.constant 0 : index
    %5 = vector.load %arg4[%c0_4, %c0_5] : memref<512x128xbf16, #tpu.memory_space<vmem>>, vector<512x128xbf16>
    %cst = arith.constant dense<0.000000e+00> : vector<32x128xf32>
    %6 = tpu.matmul %4, %5, %cst {dimension_numbers = #tpu.dot_dimension_numbers<[1], [0], [0], [1], [0, 0, 1, 1], [], []>} : vector<32x512xbf16>, vector<512x128xbf16>, vector<32x128xf32> -> vector<32x128xf32>
    %7 = arith.addf %3, %6 : vector<32x128xf32>
    %c0_6 = arith.constant 0 : index
    %c0_7 = arith.constant 0 : index
    %8 = vector.load %arg7[%c0_6, %c0_7] : memref<32x128xf32, #tpu.memory_space<vmem>>, vector<32x128xf32>
    tpu.vector_store %arg7[%c0_6, %c0_7], %7 {strides = array<i32>} : memref<32x128xf32, #tpu.memory_space<vmem>>, vector<32x128xf32>,
    %c1_i32 = arith.constant 1 : i32
    %9 = arith.cmpi eq, %arg2, %c1_i32 : i32
    %10 = arith.extui %9 : i1 to i32
    %c0_i32_8 = arith.constant 0 : i32
    %11 = arith.cmpi ne, %10, %c0_i32_8 : i32
    scf.if %11 {
      %c0_9 = arith.constant 0 : index
      %c0_10 = arith.constant 0 : index
      %12 = vector.load %arg7[%c0_9, %c0_10] : memref<32x128xf32, #tpu.memory_space<vmem>>, vector<32x128xf32>
      %c0_11 = arith.constant 0 : index
      %c0_12 = arith.constant 0 : index
      %13 = vector.load %arg5[%c0_11, %c0_12] : memref<1x128xf32, #tpu.memory_space<vmem>>, vector<1x128xf32>
      %14 = vector.broadcast %13 : vector<1x128xf32> to vector<32x128xf32>
      %15 = arith.addf %12, %14 : vector<32x128xf32>
      %c0_13 = arith.constant 0 : index
      %c0_14 = arith.constant 0 : index
      %16 = vector.load %arg6[%c0_13, %c0_14] : memref<32x128xf32, #tpu.memory_space<vmem>>, vector<32x128xf32>
      tpu.vector_store %arg6[%c0_13, %c0_14], %15 {strides = array<i32>} : memref<32x128xf32, #tpu.memory_space<vmem>>, vector<32x128xf32>,
    } else {
    }
    return
  }
  func.func @transform_0(%arg0: i32, %arg1: i32, %arg2: i32) -> (i32, i32) {
    %c0_i32 = arith.constant 0 : i32
    return %arg0, %arg2 : i32, i32
  }
  func.func @transform_1(%arg0: i32, %arg1: i32, %arg2: i32) -> (i32, i32) {
    %c0_i32 = arith.constant 0 : i32
    return %arg2, %arg1 : i32, i32
  }
  func.func @transform_2(%arg0: i32, %arg1: i32, %arg2: i32) -> (i32, i32) {
    %c0_i32 = arith.constant 0 : i32
    %c0_i32_0 = arith.constant 0 : i32
    return %c0_i32, %arg1 : i32, i32
  }
  func.func @transform_3(%arg0: i32, %arg1: i32, %arg2: i32) -> (i32, i32) {
    %c0_i32 = arith.constant 0 : i32
    return %arg0, %arg1 : i32, i32
  }
}

</mosaic_0001>

<llo_original>
// kernel: tpu_custom_call.1
$region0: #{tpu_custom_call.1}
  #allocation0 [shape = 'u32[]', space=smem, size = 0x4, offset = 0x4, fixed_abs, tag = 'smem constant byte address 0x4 - core index']
  #allocation1 [shape = 'u32[144,128]{1,0:T(1,128)}', space=vmem, size = 0x12000, scoped, tag = 'internal scratch']
  #allocation2 [shape = 'f32[32,128]{1,0:T(8,128)}', space=vmem, size = 0x4000, scoped, tag = 'scratch operand']
  %s0 = inlined_call_operand.hbm [shape: bf16[32,1024], index: 0, kind: input, shape index: {}]
  %s1 = inlined_call_operand.hbm [shape: bf16[1024,128], index: 1, kind: input, shape index: {}]
  %s2 = inlined_call_operand.vmem [shape: f32[1,128], index: 2, kind: input, shape index: {}]
  %s3 = inlined_call_operand.hbm [shape: f32[32,128], index: 3, kind: output, shape index: {}]
  %s4 = sld [smem:[#allocation0]]
  $region61: #{tpu_custom_call.1} parent=0
    _
  %s6 = ssub.s32 1, %s4
  %s7 = scalar_select 0, %s6, %s4
  $region1: #{tpu_custom_call.1} parent=0
    #allocation3 [shape = 'u8[65536]{0}', space=vmem, size = 0x10000, scoped, tag = 'input window, operand 0']
    #allocation4 [shape = 's32[2]{0}', space=sflag, size = 0x8, scoped, tag = 'scoped memory for tpu_custom_call.1']
    #allocation5 [shape = 's32[2]{0}', space=sflag, size = 0x8, scoped, tag = 'scoped memory for tpu_custom_call.1']
    #allocation6 [shape = 'u8[262144]{0}', space=vmem, size = 0x40000, scoped, tag = 'input window, operand 1']
    #allocation7 [shape = 's32[2]{0}', space=sflag, size = 0x8, scoped, tag = 'scoped memory for tpu_custom_call.1']
    #allocation8 [shape = 'u8[16384]{0}', space=vmem, size = 0x4000, scoped, tag = 'output window, operand 0, single buffered']
    %8 = vsyncpa [#allocation4], 0
    %s9 = scalar_lea.sflag [#allocation4], 1
    %10 = vsyncpa %s9, 0
    %11 = vsyncpa [#allocation7], 0
    %s12 = scalar_lea.sflag [#allocation7], 1
    %13 = vsyncpa %s12, 0
    %14 = vsyncpa [#allocation5], 0
    loop: start=0, step=1, limit=4
    $region2: #{tpu_custom_call.1} parent=1 // loop_pre_header
      _
    $region3: #{tpu_custom_call.1} parent=1 // loop_header
      %s16 = sphi 0, %s20
      %p17 = scmp.ge.s32.totalorder %s16, 4
      %s23 = sphi 0, %s42
      %s24 = sphi 0, %s38
      %s25 = sphi 0, %s34
      %s26 = sphi 0, %s23
      %s27 = sphi 0, %s24
      %s28 = sphi 0, %s25
      %s29 = sphi 0, %s26
      %s30 = sphi 0, %s27
      %s31 = sphi 0, %s28
      %s47 = sphi 0, %s49
      %s50 = sphi 0, %s47
      %s51 = sphi 0, %s50
      %s67 = sphi 0, %s51
      %s75 = sphi 0, %s77
      %s78 = sphi 0, %s75
      %s79 = sphi 0, %s78
      %s95 = sphi 0, %s79
      %s101 = sphi 0, %s103
      %s104 = sphi 0, %s101
      %s105 = sphi 0, %s104
      %s121 = sphi 0, %s105
      %s129 = sphi 0, %s131
      %s132 = sphi 0, %s129
      %s133 = sphi 0, %s132
      %s149 = sphi 0, %s133
    $region4: #{tpu_custom_call.1} parent=1 // loop_header_branch
      %19 = sbr.rel (%p17) target = $region8
    $region5: #{tpu_custom_call.1} parent=1 // loop_body
      %s21 = ssub.s32 %s16, 1
      %s22 = ssub.s32 %s16, 2
      %s32 = sadd.s32 1, %s25
      %p33 = scmp.ge.s32.totalorder %s32, 2
      %s34 = scalar_select %p33, 0, %s32
      %s35 = sadd.s32 1, %s24
      %s36 = scalar_select %p33, %s35, %s24
      %p37 = scmp.ge.s32.totalorder %s36, 1
      %s38 = scalar_select %p37, 0, %s36
      %s39 = sadd.s32 1, %s23
      %s40 = scalar_select %p37, %s39, %s23
      %p41 = scmp.ge.s32.totalorder %s40, 1
      %s42 = scalar_select %p41, 0, %s40
      %s43 = ssub.s32 %s23, %s42
      %s44 = ssub.s32 %s25, %s34
      %s45 = sor.u32 %s43, %s44
      %p46 = scmp.eq.s32.totalorder %s45, 0
      %s48 = sadd.s32 %s47, 1
      %s49 = scalar_select %p46, %s47, %s48
      %p52 = pneg %p46
      %p53 = scmp.eq.s32.totalorder %s16, 1
      %p54 = por %p52, %p53
      %p55 = scmp.ne.s32.totalorder %s47, %s50
      %p56 = scmp.eq.s32.totalorder %s16, 0
      %p57 = por %p55, %p56
      %p58 = scmp.ne.s32.totalorder %s47, %s50
      %p59 = scmp.eq.s32.totalorder %s21, 1
      %p60 = por %p58, %p59
      %p61 = scmp.ne.s32.totalorder %s50, %s51
      %p62 = scmp.eq.s32.totalorder %s21, 0
      %p63 = por %p61, %p62
      %p64 = scmp.ne.s32.totalorder %s50, %s51
      %p65 = scmp.eq.s32.totalorder %s22, 1
      %p66 = por %p64, %p65
      %p68 = scmp.ne.s32.totalorder %s51, %s67
      %p69 = scmp.eq.s32.totalorder %s22, 0
      %p70 = por %p68, %p69
      %s71 = ssub.s32 %s25, %s34
      %s72 = ssub.s32 %s24, %s38
      %s73 = sor.u32 %s71, %s72
      %p74 = scmp.eq.s32.totalorder %s73, 0
      %s76 = sadd.s32 %s75, 1
      %s77 = scalar_select %p74, %s75, %s76
      %p80 = pneg %p74
      %p81 = scmp.eq.s32.totalorder %s16, 1
      %p82 = por %p80, %p81
      %p83 = scmp.ne.s32.totalorder %s75, %s78
      %p84 = scmp.eq.s32.totalorder %s16, 0
      %p85 = por %p83, %p84
      %p86 = scmp.ne.s32.totalorder %s75, %s78
      %p87 = scmp.eq.s32.totalorder %s21, 1
      %p88 = por %p86, %p87
      %p89 = scmp.ne.s32.totalorder %s78, %s79
      %p90 = scmp.eq.s32.totalorder %s21, 0
      %p91 = por %p89, %p90
      %p92 = scmp.ne.s32.totalorder %s78, %s79
      %p93 = scmp.eq.s32.totalorder %s22, 1
      %p94 = por %p92, %p93
      %p96 = scmp.ne.s32.totalorder %s79, %s95
      %p97 = scmp.eq.s32.totalorder %s22, 0
      %p98 = por %p96, %p97
      %s99 = ssub.s32 %s24, %s38
      %p100 = scmp.eq.s32.totalorder %s99, 0
      %s102 = sadd.s32 %s101, 1
      %s103 = scalar_select %p100, %s101, %s102
      %p106 = pneg %p100
      %p107 = scmp.eq.s32.totalorder %s16, 1
      %p108 = por %p106, %p107
      %p109 = scmp.ne.s32.totalorder %s101, %s104
      %p110 = scmp.eq.s32.totalorder %s16, 0
      %p111 = por %p109, %p110
      %p112 = scmp.ne.s32.totalorder %s101, %s104
      %p113 = scmp.eq.s32.totalorder %s21, 1
      %p114 = por %p112, %p113
      %p115 = scmp.ne.s32.totalorder %s104, %s105
      %p116 = scmp.eq.s32.totalorder %s21, 0
      %p117 = por %p115, %p116
      %p118 = scmp.ne.s32.totalorder %s104, %s105
      %p119 = scmp.eq.s32.totalorder %s22, 1
      %p120 = por %p118, %p119
      %p122 = scmp.ne.s32.totalorder %s105, %s121
      %p123 = scmp.eq.s32.totalorder %s22, 0
      %p124 = por %p122, %p123
      %s125 = ssub.s32 %s23, %s42
      %s126 = ssub.s32 %s24, %s38
      %s127 = sor.u32 %s125, %s126
      %p128 = scmp.eq.s32.totalorder %s127, 0
      %s130 = sadd.s32 %s129, 1
      %s131 = scalar_select %p128, %s129, %s130
      %p134 = pneg %p128
      %p135 = scmp.eq.s32.totalorder %s16, 1
      %p136 = por %p134, %p135
      %p137 = scmp.ne.s32.totalorder %s129, %s132
      %p138 = scmp.eq.s32.totalorder %s16, 0
      %p139 = por %p137, %p138
      %p140 = scmp.ne.s32.totalorder %s129, %s132
      %p141 = scmp.eq.s32.totalorder %s21, 1
      %p142 = por %p140, %p141
      %p143 = scmp.ne.s32.totalorder %s132, %s133
      %p144 = scmp.eq.s32.totalorder %s21, 0
      %p145 = por %p143, %p144
      %p146 = scmp.ne.s32.totalorder %s132, %s133
      %p147 = scmp.eq.s32.totalorder %s22, 1
      %p148 = por %p146, %p147
      %p150 = scmp.ne.s32.totalorder %s133, %s149
      %p151 = scmp.eq.s32.totalorder %s22, 0
      %p152 = por %p150, %p151
      %p153 = scmp.le.s32.totalorder 1, %s16
      %p154 = scmp.lt.s32.totalorder %s16, 3
      %p155 = pnand %p153, %p154
      %p156 = pneg %p155
      // Predicated region
      $region9: #{tpu_custom_call.1} parent=5 // pred_check
        _
      $region10: #{tpu_custom_call.1} parent=5 // pred_check_branch
        %158 = sbr.rel (%p155) target = $region12
      $region11: #{tpu_custom_call.1} parent=5 // pred_region
        %s159 = ssub.s32 %s16, 1
        // Predicated region
        $region13: #{tpu_custom_call.1} parent=11 // pred_check
          %p160 = pneg %p117
        $region14: #{tpu_custom_call.1} parent=11 // pred_check_branch
          %162 = sbr.rel (%p160) target = $region16
        $region15: #{tpu_custom_call.1} parent=11 // pred_region
          %p163 = scmp.lt.s32.totalorder %s27, 0
          %s164 = scalar_select %p163, %s27, 0
          %s165 = scalar_lea.vmem %s2, %s164
        $region16: #{tpu_custom_call.1} parent=11 // pred_fallthru
          _
      $region12: #{tpu_custom_call.1} parent=5 // pred_fallthru
        _
      %p166 = scmp.lt.s32.totalorder %s16, 2
      // Predicated region
      $region17: #{tpu_custom_call.1} parent=5 // pred_check
        %p167 = pneg %p166
      $region18: #{tpu_custom_call.1} parent=5 // pred_check_branch
        %169 = sbr.rel (%p167) target = $region20
      $region19: #{tpu_custom_call.1} parent=5 // pred_region
        // Predicated region
        $region21: #{tpu_custom_call.1} parent=19 // pred_check
          %p170 = pneg %p57
        $region22: #{tpu_custom_call.1} parent=19 // pred_check_branch
          %172 = sbr.rel (%p170) target = $region24
        $region23: #{tpu_custom_call.1} parent=19 // pred_region
          %s173 = sand.u32 %s47, 1
          %s174 = scalar_lea.sflag [#allocation4], %s173
          %s175 = sand.u32 %s47, 1
          %s176 = smul.addr %s175, 64
          %s177 = scalar_lea.vmem [#allocation3], %s176
          %s178 = smul.u32 4, %s23
          %s179 = smul.u32 4, %s25
          %s181 = ssub.s32 1024, 1024
          %182 = vsyncadd %s174, %s181
          %s183 = smul.addr %s178, 8
          %s184 = sadd.s32 %s179, %s183
          %s185 = smul.addr %s184, 64
          %s186 = scalar_lea.hbm %s0, %s185
          %s187 = sshll.u32 %s177, 4
          %s188 = int_to_ptr.vmem [resolvable:$true] %s187
          %193 = dma.hbm_to_vmem [thread:$0]  %s186, 1024, %s188, %s174, 512, 256, 16
        $region24: #{tpu_custom_call.1} parent=19 // pred_fallthru
          _
        // Predicated region
        $region25: #{tpu_custom_call.1} parent=19 // pred_check
          %p194 = pneg %p85
        $region26: #{tpu_custom_call.1} parent=19 // pred_check_branch
          %196 = sbr.rel (%p194) target = $region28
        $region27: #{tpu_custom_call.1} parent=19 // pred_region
          %s197 = sand.u32 %s75, 1
          %s198 = scalar_lea.sflag [#allocation7], %s197
          %s199 = sand.u32 %s75, 1
          %s200 = smul.addr %s199, 256
          %s201 = scalar_lea.vmem [#allocation6], %s200
          %s202 = smul.u32 64, %s25
          %s204 = ssub.s32 4096, 4096
          %205 = vsyncadd %s198, %s204
          %s206 = sadd.s32 %s24, %s202
          %s207 = smul.addr %s206, 64
          %s208 = scalar_lea.hbm %s1, %s207
          %s209 = sshll.u32 %s201, 4
          %s210 = int_to_ptr.vmem [resolvable:$true] %s209
          %215 = dma.hbm_to_vmem [thread:$0]  %s208, 4096, %s210, %s198, 64, 64, 4
        $region28: #{tpu_custom_call.1} parent=19 // pred_fallthru
          _
      $region20: #{tpu_custom_call.1} parent=5 // pred_fallthru
        _
      %p216 = scmp.le.s32.totalorder 1, %s16
      %p217 = scmp.lt.s32.totalorder %s16, 3
      %p218 = pnand %p216, %p217
      %p219 = pneg %p218
      // Predicated region
      $region29: #{tpu_custom_call.1} parent=5 // pred_check
        _
      $region30: #{tpu_custom_call.1} parent=5 // pred_check_branch
        %221 = sbr.rel (%p218) target = $region32
      $region31: #{tpu_custom_call.1} parent=5 // pred_region
        %s222 = ssub.s32 %s16, 1
        %s223 = sand.u32 %s50, 1
        %s224 = scalar_lea.sflag [#allocation4], %s223
        %s225 = sand.u32 %s50, 1
        %s226 = smul.addr %s225, 64
        %s227 = scalar_lea.vmem [#allocation3], %s226
        // Predicated region
        $region33: #{tpu_custom_call.1} parent=31 // pred_check
          %p228 = pneg %p63
        $region34: #{tpu_custom_call.1} parent=31 // pred_check_branch
          %230 = sbr.rel (%p228) target = $region36
        $region35: #{tpu_custom_call.1} parent=31 // pred_region
          %231 = dma.done %s224, 1024
        $region36: #{tpu_custom_call.1} parent=31 // pred_fallthru
          _
        %s232 = sand.u32 %s78, 1
        %s233 = scalar_lea.sflag [#allocation7], %s232
        %s234 = sand.u32 %s78, 1
        %s235 = smul.addr %s234, 256
        %s236 = scalar_lea.vmem [#allocation6], %s235
        // Predicated region
        $region37: #{tpu_custom_call.1} parent=31 // pred_check
          %p237 = pneg %p91
        $region38: #{tpu_custom_call.1} parent=31 // pred_check_branch
          %239 = sbr.rel (%p237) target = $region40
        $region39: #{tpu_custom_call.1} parent=31 // pred_region
          %240 = dma.done %s233, 4096
        $region40: #{tpu_custom_call.1} parent=31 // pred_fallthru
          _
        %s241 = sand.u32 %s50, 1
        %s242 = scalar_lea.sflag [#allocation4], %s241
        %s243 = sand.u32 %s50, 1
        %s244 = smul.addr %s243, 64
        %s245 = scalar_lea.vmem [#allocation3], %s244
        %p246 = pneg %p63
        %p247 = pneg %p60
        %s248 = sand.u32 %s78, 1
        %s249 = scalar_lea.sflag [#allocation7], %s248
        %s250 = sand.u32 %s78, 1
        %s251 = smul.addr %s250, 256
        %s252 = scalar_lea.vmem [#allocation6], %s251
        %p253 = pneg %p91
        %p254 = pneg %p88
        %p255 = scmp.lt.s32.totalorder %s27, 0
        %s256 = scalar_select %p255, %s27, 0
        %s257 = scalar_lea.vmem %s2, %s256
        %p258 = pneg %p117
        %p259 = pneg %p114
        %p260 = pneg %p145
        %p261 = pneg %p142
        %s262 = smul.u32 4, %s26
        %s263 = smul.u32 4, %s28
        %s264 = smul.u32 64, %s28
        %p265 = scmp.lt.s32.totalorder %s27, 0
        %s266 = scalar_select %p265, %s27, 0
        %s267 = scalar_lea.vmem %s2, %s266
        %s268 = smul.u32 4, %s26
        %p270 = scmp.eq.s32.totalorder %s28, 0
        // Predicated region
        $region41: #{tpu_custom_call.1} parent=31 // pred_check
          %p271 = pneg %p270
        $region42: #{tpu_custom_call.1} parent=31 // pred_check_branch
          %273 = sbr.rel (%p271) target = $region44
        $region43: #{tpu_custom_call.1} parent=31 // pred_region
          %274 = vst [vmem:[#allocation2] sm:$0xff] 0.0
          %275 = vst [vmem:[#allocation2 + $0x8] sm:$0xff] 0.0
          %276 = vst [vmem:[#allocation2 + $0x10] sm:$0xff] 0.0
          %277 = vst [vmem:[#allocation2 + $0x18] sm:$0xff] 0.0
        $region44: #{tpu_custom_call.1} parent=31 // pred_fallthru
          _
        %v278 = vld [vmem:[#allocation2] sm:$0xff]
        %v279 = vld [vmem:[#allocation2 + $0x8] sm:$0xff]
        %v280 = vld [vmem:[#allocation2 + $0x10] sm:$0xff]
        %v281 = vld [vmem:[#allocation2 + $0x18] sm:$0xff]
        %v282 = vld [vmem:[%s227] sm:$0xff]
        %v283 = vld [vmem:[%s227 + $0x8] sm:$0xff]
        %v284 = vld [vmem:[%s227 + $0x10] sm:$0xff]
        %v285 = vld [vmem:[%s227 + $0x18] sm:$0xff]
        %v286 = vld [vmem:[%s227 + $0x20] sm:$0xff]
        %v287 = vld [vmem:[%s227 + $0x28] sm:$0xff]
        %v288 = vld [vmem:[%s227 + $0x30] sm:$0xff]
        %v289 = vld [vmem:[%s227 + $0x38] sm:$0xff]
        %v290 = vld [vmem:[%s236] sm:$0xf]
        %v291 = vld [vmem:[%s236 + $0x4] sm:$0xf]
        %v292 = vld [vmem:[%s236 + $0x8] sm:$0xf]
        %v293 = vld [vmem:[%s236 + $0xc] sm:$0xf]
        %v294 = vld [vmem:[%s236 + $0x10] sm:$0xf]
        %v295 = vld [vmem:[%s236 + $0x14] sm:$0xf]
        %v296 = vld [vmem:[%s236 + $0x18] sm:$0xf]
        %v297 = vld [vmem:[%s236 + $0x1c] sm:$0xf]
        %v298 = vld [vmem:[%s236 + $0x20] sm:$0xf]
        %v299 = vld [vmem:[%s236 + $0x24] sm:$0xf]
        %v300 = vld [vmem:[%s236 + $0x28] sm:$0xf]
        %v301 = vld [vmem:[%s236 + $0x2c] sm:$0xf]
        %v302 = vld [vmem:[%s236 + $0x30] sm:$0xf]
        %v303 = vld [vmem:[%s236 + $0x34] sm:$0xf]
        %v304 = vld [vmem:[%s236 + $0x38] sm:$0xf]
        %v305 = vld [vmem:[%s236 + $0x3c] sm:$0xf]
        %v306 = vld [vmem:[%s236 + $0x40] sm:$0xf]
        %v307 = vld [vmem:[%s236 + $0x44] sm:$0xf]
        %v308 = vld [vmem:[%s236 + $0x48] sm:$0xf]
        %v309 = vld [vmem:[%s236 + $0x4c] sm:$0xf]
        %v310 = vld [vmem:[%s236 + $0x50] sm:$0xf]
        %v311 = vld [vmem:[%s236 + $0x54] sm:$0xf]
        %v312 = vld [vmem:[%s236 + $0x58] sm:$0xf]
        %v313 = vld [vmem:[%s236 + $0x5c] sm:$0xf]
        %v314 = vld [vmem:[%s236 + $0x60] sm:$0xf]
        %v315 = vld [vmem:[%s236 + $0x64] sm:$0xf]
        %v316 = vld [vmem:[%s236 + $0x68] sm:$0xf]
        %v317 = vld [vmem:[%s236 + $0x6c] sm:$0xf]
        %v318 = vld [vmem:[%s236 + $0x70] sm:$0xf]
        %v319 = vld [vmem:[%s236 + $0x74] sm:$0xf]
        %v320 = vld [vmem:[%s236 + $0x78] sm:$0xf]
        %v321 = vld [vmem:[%s236 + $0x7c] sm:$0xf]
        %v322 = vld [vmem:[%s236 + $0x80] sm:$0xf]
        %v323 = vld [vmem:[%s236 + $0x84] sm:$0xf]
        %v324 = vld [vmem:[%s236 + $0x88] sm:$0xf]
        %v325 = vld [vmem:[%s236 + $0x8c] sm:$0xf]
        %v326 = vld [vmem:[%s236 + $0x90] sm:$0xf]
        %v327 = vld [vmem:[%s236 + $0x94] sm:$0xf]
        %v328 = vld [vmem:[%s236 + $0x98] sm:$0xf]
        %v329 = vld [vmem:[%s236 + $0x9c] sm:$0xf]
        %v330 = vld [vmem:[%s236 + $0xa0] sm:$0xf]
        %v331 = vld [vmem:[%s236 + $0xa4] sm:$0xf]
        %v332 = vld [vmem:[%s236 + $0xa8] sm:$0xf]
        %v333 = vld [vmem:[%s236 + $0xac] sm:$0xf]
        %v334 = vld [vmem:[%s236 + $0xb0] sm:$0xf]
        %v335 = vld [vmem:[%s236 + $0xb4] sm:$0xf]
        %v336 = vld [vmem:[%s236 + $0xb8] sm:$0xf]
        %v337 = vld [vmem:[%s236 + $0xbc] sm:$0xf]
        %v338 = vld [vmem:[%s236 + $0xc0] sm:$0xf]
        %v339 = vld [vmem:[%s236 + $0xc4] sm:$0xf]
        %v340 = vld [vmem:[%s236 + $0xc8] sm:$0xf]
        %v341 = vld [vmem:[%s236 + $0xcc] sm:$0xf]
        %v342 = vld [vmem:[%s236 + $0xd0] sm:$0xf]
        %v343 = vld [vmem:[%s236 + $0xd4] sm:$0xf]
        %v344 = vld [vmem:[%s236 + $0xd8] sm:$0xf]
        %v345 = vld [vmem:[%s236 + $0xdc] sm:$0xf]
        %v346 = vld [vmem:[%s236 + $0xe0] sm:$0xf]
        %v347 = vld [vmem:[%s236 + $0xe4] sm:$0xf]
        %v348 = vld [vmem:[%s236 + $0xe8] sm:$0xf]
        %v349 = vld [vmem:[%s236 + $0xec] sm:$0xf]
        %v350 = vld [vmem:[%s236 + $0xf0] sm:$0xf]
        %v351 = vld [vmem:[%s236 + $0xf4] sm:$0xf]
        %v352 = vld [vmem:[%s236 + $0xf8] sm:$0xf]
        %v353 = vld [vmem:[%s236 + $0xfc] sm:$0xf]
        %v362 = vunpack.c.l.b16 %v282
        %v363 = vunpack.c.h.b16 %v282
        %v364 = vunpack.c.l.b16 %v283
        %v365 = vunpack.c.h.b16 %v283
        %v366 = vunpack.c.l.b16 %v284
        %v367 = vunpack.c.h.b16 %v284
        %v368 = vunpack.c.l.b16 %v285
        %v369 = vunpack.c.h.b16 %v285
        %v370 = vunpack.c.l.b16 %v286
        %v371 = vunpack.c.h.b16 %v286
        %v372 = vunpack.c.l.b16 %v287
        %v373 = vunpack.c.h.b16 %v287
        %v374 = vunpack.c.l.b16 %v288
        %v375 = vunpack.c.h.b16 %v288
        %v376 = vunpack.c.l.b16 %v289
        %v377 = vunpack.c.h.b16 %v289
        %v378 = vpack.c.b16 %v366, %v362
        %v379 = vpack.c.b16 %v367, %v363
        %v380 = vpack.c.b16 %v368, %v364
        %v381 = vpack.c.b16 %v369, %v365
        %v382 = vpack.c.b16 %v374, %v370
        %v383 = vpack.c.b16 %v375, %v371
        %v384 = vpack.c.b16 %v376, %v372
        %v385 = vpack.c.b16 %v377, %v373
        %v458 = vunpack.c.l.b16 %v290
        %v459 = vunpack.c.l.b16 %v291
        %v460 = vunpack.c.l.b16 %v292
        %v461 = vunpack.c.l.b16 %v293
        %v462 = vunpack.c.l.b16 %v294
        %v463 = vunpack.c.l.b16 %v295
        %v464 = vunpack.c.l.b16 %v296
        %v465 = vunpack.c.l.b16 %v297
        %v466 = vunpack.c.l.b16 %v298
        %v467 = vunpack.c.l.b16 %v299
        %v468 = vunpack.c.l.b16 %v300
        %v469 = vunpack.c.l.b16 %v301
        %v470 = vunpack.c.l.b16 %v302
        %v471 = vunpack.c.l.b16 %v303
        %v472 = vunpack.c.l.b16 %v304
        %v473 = vunpack.c.l.b16 %v305
        %v474 = vunpack.c.l.b16 %v306
        %v475 = vunpack.c.l.b16 %v307
        %v476 = vunpack.c.l.b16 %v308
        %v477 = vunpack.c.l.b16 %v309
        %v478 = vunpack.c.l.b16 %v310
        %v479 = vunpack.c.l.b16 %v311
        %v480 = vunpack.c.l.b16 %v312
        %v481 = vunpack.c.l.b16 %v313
        %v482 = vunpack.c.l.b16 %v314
        %v483 = vunpack.c.l.b16 %v315
        %v484 = vunpack.c.l.b16 %v316
        %v485 = vunpack.c.l.b16 %v317
        %v486 = vunpack.c.l.b16 %v318
        %v487 = vunpack.c.l.b16 %v319
        %v488 = vunpack.c.l.b16 %v320
        %v489 = vunpack.c.l.b16 %v321
        %v490 = vunpack.c.l.b16 %v322
        %v491 = vunpack.c.l.b16 %v323
        %v492 = vunpack.c.l.b16 %v324
        %v493 = vunpack.c.l.b16 %v325
        %v494 = vunpack.c.l.b16 %v326
        %v495 = vunpack.c.l.b16 %v327
        %v496 = vunpack.c.l.b16 %v328
        %v497 = vunpack.c.l.b16 %v329
        %v498 = vunpack.c.l.b16 %v330
        %v499 = vunpack.c.l.b16 %v331
        %v500 = vunpack.c.l.b16 %v332
        %v501 = vunpack.c.l.b16 %v333
        %v502 = vunpack.c.l.b16 %v334
        %v503 = vunpack.c.l.b16 %v335
        %v504 = vunpack.c.l.b16 %v336
        %v505 = vunpack.c.l.b16 %v337
        %v506 = vunpack.c.l.b16 %v338
        %v507 = vunpack.c.l.b16 %v339
        %v508 = vunpack.c.l.b16 %v340
        %v509 = vunpack.c.l.b16 %v341
        %v510 = vunpack.c.l.b16 %v342
        %v511 = vunpack.c.l.b16 %v343
        %v512 = vunpack.c.l.b16 %v344
        %v513 = vunpack.c.l.b16 %v345
        %v514 = vunpack.c.l.b16 %v346
        %v515 = vunpack.c.l.b16 %v347
        %v516 = vunpack.c.l.b16 %v348
        %v517 = vunpack.c.l.b16 %v349
        %v518 = vunpack.c.l.b16 %v350
        %v519 = vunpack.c.l.b16 %v351
        %v520 = vunpack.c.l.b16 %v352
        %v521 = vunpack.c.l.b16 %v353
        %v522 = vpack.c.b16 %v459, %v458
        %v523 = vpack.c.b16 %v461, %v460
        %v524 = vpack.c.b16 %v463, %v462
        %v525 = vpack.c.b16 %v465, %v464
        %v526 = vpack.c.b16 %v467, %v466
        %v527 = vpack.c.b16 %v469, %v468
        %v528 = vpack.c.b16 %v471, %v470
        %v529 = vpack.c.b16 %v473, %v472
        %v530 = vpack.c.b16 %v475, %v474
        %v531 = vpack.c.b16 %v477, %v476
        %v532 = vpack.c.b16 %v479, %v478
        %v533 = vpack.c.b16 %v481, %v480
        %v534 = vpack.c.b16 %v483, %v482
        %v535 = vpack.c.b16 %v485, %v484
        %v536 = vpack.c.b16 %v487, %v486
        %v537 = vpack.c.b16 %v489, %v488
        %v538 = vpack.c.b16 %v491, %v490
        %v539 = vpack.c.b16 %v493, %v492
        %v540 = vpack.c.b16 %v495, %v494
        %v541 = vpack.c.b16 %v497, %v496
        %v542 = vpack.c.b16 %v499, %v498
        %v543 = vpack.c.b16 %v501, %v500
        %v544 = vpack.c.b16 %v503, %v502
        %v545 = vpack.c.b16 %v505, %v504
        %v546 = vpack.c.b16 %v507, %v506
        %v547 = vpack.c.b16 %v509, %v508
        %v548 = vpack.c.b16 %v511, %v510
        %v549 = vpack.c.b16 %v513, %v512
        %v550 = vpack.c.b16 %v515, %v514
        %v551 = vpack.c.b16 %v517, %v516
        %v552 = vpack.c.b16 %v519, %v518
        %v553 = vpack.c.b16 %v521, %v520
        %586 = vmatprep.subr.bf16.mxu0 0
        %587 = vmatpush1.bf16.msra.mxu0 %v522
        %588 = vmatprep.subr.bf16.mxu0 0
        %589 = vmatpush1.bf16.msra.mxu0 %v523
        %590 = vmatprep.subr.bf16.mxu0 0
        %591 = vmatpush1.bf16.msra.mxu0 %v524
        %592 = vmatprep.subr.bf16.mxu0 0
        %593 = vmatpush1.bf16.msra.mxu0 %v525
        %594 = vmatprep.subr.bf16.mxu0 0
        %595 = vmatpush1.bf16.msra.mxu0 %v526
        %596 = vmatprep.subr.bf16.mxu0 0
        %597 = vmatpush1.bf16.msra.mxu0 %v527
        %598 = vmatprep.subr.bf16.mxu0 0
        %599 = vmatpush1.bf16.msra.mxu0 %v528
        %600 = vmatprep.subr.bf16.mxu0 0
        %601 = vmatpush1.bf16.msra.mxu0 %v529
        %602 = vmatprep.subr.bf16.mxu0 0
        %603 = vmatpush1.bf16.msra.mxu0 %v530
        %604 = vmatprep.subr.bf16.mxu0 0
        %605 = vmatpush1.bf16.msra.mxu0 %v531
        %606 = vmatprep.subr.bf16.mxu0 0
        %607 = vmatpush1.bf16.msra.mxu0 %v532
        %608 = vmatprep.subr.bf16.mxu0 0
        %609 = vmatpush1.bf16.msra.mxu0 %v533
        %610 = vmatprep.subr.bf16.mxu0 0
        %611 = vmatpush1.bf16.msra.mxu0 %v534
        %612 = vmatprep.subr.bf16.mxu0 0
        %613 = vmatpush1.bf16.msra.mxu0 %v535
        %614 = vmatprep.subr.bf16.mxu0 0
        %615 = vmatpush1.bf16.msra.mxu0 %v536
        %616 = vmatprep.subr.bf16.mxu0 0
        %617 = vmatpush1.bf16.msra.mxu0 %v537
        %618 = vmatprep.mubr.bf16.mxu0 %v379
        %619 = vmatmul.mubr.bf16.gmra.mrb[0].mxu0 %v378
        %v620 = vpop.f32.mrb[0].mxu0
        %v621 = vadd.f32 0.0, %v620
        %v622 = vpop.f32.mrb[0].mxu0
        %v623 = vpop.f32.mrb[0].mxu0
        %v624 = vadd.f32 0.0, %v623
        %v625 = vpop.f32.mrb[0].mxu0
        %626 = vmatprep.mubr.bf16.mxu0 %v383
        %627 = vmatmul.mubr.bf16.gmra.mrb[0].mxu0 %v382
        %v628 = vpop.f32.mrb[0].mxu0
        %v629 = vadd.f32 0.0, %v628
        %v630 = vpop.f32.mrb[0].mxu0
        %v631 = vpop.f32.mrb[0].mxu0
        %v632 = vadd.f32 0.0, %v631
        %v633 = vpop.f32.mrb[0].mxu0
        %634 = vdwg.mxu0
        %635 = vmatprep.subr.bf16.mxu0 0
        %636 = vmatpush1.bf16.msra.mxu0 %v538
        %637 = vmatprep.subr.bf16.mxu0 0
        %638 = vmatpush1.bf16.msra.mxu0 %v539
        %639 = vmatprep.subr.bf16.mxu0 0
        %640 = vmatpush1.bf16.msra.mxu0 %v540
        %641 = vmatprep.subr.bf16.mxu0 0
        %642 = vmatpush1.bf16.msra.mxu0 %v541
        %643 = vmatprep.subr.bf16.mxu0 0
        %644 = vmatpush1.bf16.msra.mxu0 %v542
        %645 = vmatprep.subr.bf16.mxu0 0
        %646 = vmatpush1.bf16.msra.mxu0 %v543
        %647 = vmatprep.subr.bf16.mxu0 0
        %648 = vmatpush1.bf16.msra.mxu0 %v544
        %649 = vmatprep.subr.bf16.mxu0 0
        %650 = vmatpush1.bf16.msra.mxu0 %v545
        %651 = vmatprep.subr.bf16.mxu0 0
        %652 = vmatpush1.bf16.msra.mxu0 %v546
        %653 = vmatprep.subr.bf16.mxu0 0
        %654 = vmatpush1.bf16.msra.mxu0 %v547
        %655 = vmatprep.subr.bf16.mxu0 0
        %656 = vmatpush1.bf16.msra.mxu0 %v548
        %657 = vmatprep.subr.bf16.mxu0 0
        %658 = vmatpush1.bf16.msra.mxu0 %v549
        %659 = vmatprep.subr.bf16.mxu0 0
        %660 = vmatpush1.bf16.msra.mxu0 %v550
        %661 = vmatprep.subr.bf16.mxu0 0
        %662 = vmatpush1.bf16.msra.mxu0 %v551
        %663 = vmatprep.subr.bf16.mxu0 0
        %664 = vmatpush1.bf16.msra.mxu0 %v552
        %665 = vmatprep.subr.bf16.mxu0 0
        %666 = vmatpush1.bf16.msra.mxu0 %v553
        %667 = vmatprep.mubr.bf16.mxu0 %v381
        %668 = vmatmul.mubr.bf16.gmra.mrb[0].mxu0 %v380
        %v669 = vpop.f32.mrb[0].mxu0
        %v670 = vadd.f32 %v621, %v669
        %v671 = vpop.f32.mrb[0].mxu0
        %v672 = vpop.f32.mrb[0].mxu0
        %v673 = vadd.f32 %v624, %v672
        %v674 = vpop.f32.mrb[0].mxu0
        %675 = vmatprep.mubr.bf16.mxu0 %v385
        %676 = vmatmul.mubr.bf16.gmra.mrb[0].mxu0 %v384
        %v677 = vpop.f32.mrb[0].mxu0
        %v678 = vadd.f32 %v629, %v677
        %v679 = vpop.f32.mrb[0].mxu0
        %v680 = vpop.f32.mrb[0].mxu0
        %v681 = vadd.f32 %v632, %v680
        %v682 = vpop.f32.mrb[0].mxu0
        %683 = vdwg.mxu0
        %v684 = vadd.f32 %v278, %v670
        %v685 = vadd.f32 %v279, %v673
        %v686 = vadd.f32 %v280, %v678
        %v687 = vadd.f32 %v281, %v681
        %688 = vst [vmem:[#allocation2] sm:$0xff] %v684
        %689 = vst [vmem:[#allocation2 + $0x8] sm:$0xff] %v685
        %690 = vst [vmem:[#allocation2 + $0x10] sm:$0xff] %v686
        %691 = vst [vmem:[#allocation2 + $0x18] sm:$0xff] %v687
        %p692 = scmp.eq.s32.totalorder %s28, 1
        // Predicated region
        $region45: #{tpu_custom_call.1} parent=31 // pred_check
          %p693 = pneg %p692
        $region46: #{tpu_custom_call.1} parent=31 // pred_check_branch
          %695 = sbr.rel (%p693) target = $region48
        $region47: #{tpu_custom_call.1} parent=31 // pred_region
          %v696 = vld [vmem:[#allocation2] sm:$0xff]
          %v697 = vld [vmem:[#allocation2 + $0x8] sm:$0xff]
          %v698 = vld [vmem:[#allocation2 + $0x10] sm:$0xff]
          %v699 = vld [vmem:[#allocation2 + $0x18] sm:$0xff]
          %v700 = vld [vmem:[%s267] sm:$0x1]
          %v702 = vlaneseq
          %v703 = vshrl.u32 %v702, 7
          %v704 = vsub.s32 0, %v703
          %v705 = vrot.slane %v700, %v704
          %v707 = vadd.f32 %v696, %v705
          %v708 = vadd.f32 %v697, %v705
          %v709 = vadd.f32 %v698, %v705
          %v710 = vadd.f32 %v699, %v705
          %711 = vst [vmem:[#allocation8] sm:$0xff] %v707
          %712 = vst [vmem:[#allocation8 + $0x8] sm:$0xff] %v708
          %713 = vst [vmem:[#allocation8 + $0x10] sm:$0xff] %v709
          %714 = vst [vmem:[#allocation8 + $0x18] sm:$0xff] %v710
        $region48: #{tpu_custom_call.1} parent=31 // pred_fallthru
          _
        // Predicated region
        $region49: #{tpu_custom_call.1} parent=31 // pred_check
          %p715 = pneg %p142
        $region50: #{tpu_custom_call.1} parent=31 // pred_check_branch
          %717 = sbr.rel (%p715) target = $region52
        $region51: #{tpu_custom_call.1} parent=31 // pred_region
          %s718 = smul.u32 4, %s26
          %s720 = ssub.s32 512, 512
          %721 = vsyncadd [#allocation5], %s720
          %s722 = sadd.s32 %s27, %s718
          %s723 = smul.addr %s722, 128
          %s724 = scalar_lea.hbm %s3, %s723
          %s725 = sshll.u32 [#allocation8], 4
          %s726 = int_to_ptr.vmem [resolvable:$true] %s725
          %731 = dma.vmem_to_hbm [thread:$0]  %s726, 512, %s724, [#allocation5], 128, 128, 8
        $region52: #{tpu_custom_call.1} parent=31 // pred_fallthru
          _
        // Predicated region
        $region53: #{tpu_custom_call.1} parent=31 // pred_check
          %p732 = pneg %p142
        $region54: #{tpu_custom_call.1} parent=31 // pred_check_branch
          %734 = sbr.rel (%p732) target = $region56
        $region55: #{tpu_custom_call.1} parent=31 // pred_region
          %735 = dma.done [#allocation5], 512
        $region56: #{tpu_custom_call.1} parent=31 // pred_fallthru
          _
      $region32: #{tpu_custom_call.1} parent=5 // pred_fallthru
        _
      %p736 = scmp.le.s32.totalorder 2, %s16
      // Predicated region
      $region57: #{tpu_custom_call.1} parent=5 // pred_check
        %p737 = pneg %p736
      $region58: #{tpu_custom_call.1} parent=5 // pred_check_branch
        %739 = sbr.rel (%p737) target = $region60
      $region59: #{tpu_custom_call.1} parent=5 // pred_region
        %s740 = ssub.s32 %s16, 2
      $region60: #{tpu_custom_call.1} parent=5 // pred_fallthru
        _
    $region6: #{tpu_custom_call.1} parent=1 // loop_footer
      %s20 = sadd.s32 1, %s16
    $region7: #{tpu_custom_call.1} parent=1 // loop_footer_branch
      %15 = sbr.rel target = $region3
    $region8: #{tpu_custom_call.1} parent=1 // loop_exit
      _
    %741 = vsyncpa [#allocation4], 1
    %s742 = scalar_lea.sflag [#allocation4], 1
    %743 = vsyncpa %s742, 1
    %744 = vsyncpa [#allocation7], 1
    %s745 = scalar_lea.sflag [#allocation7], 1
    %746 = vsyncpa %s745, 1
    %747 = vsyncpa [#allocation5], 1
    %s748 = scalar_lea.sflag [#allocation5], 1
    %749 = vsyncpa %s748, 1

</llo_original>
